<compile_context>
chip_gen: v5e
topology: v5e:2x2
jax: 0.10.0
libtpu: 0.0.40
codegen_flags: <defaults>
</compile_context>

<pallas_src>
from functools import partial

import jax
import jax.numpy as jnp
import numpy as np
from jax import lax
from jax.experimental import pallas as pl
from jax.experimental.pallas import tpu as pltpu


def _round_up(x, m):
    return ((x + m - 1) // m) * m


def sentiment_attention_kernel(enc_ref, w_ref, b_ref, argblk_ref, bias_ref, out_ref,
                               *, approx_recip=True):
    # enc_ref:    (bB, S, Ep)   encoder states, MXU dtype (bf16 in production)
    # w_ref:      (Ep, 2A)      [W1.T | W2.T]; rows >= E are zero padding
    # b_ref:      (1, 2A)       [b1 | b2], f32
    # argblk_ref: (bB, 2, 2A)   per batch: row0 = [arg1, 0], row1 = [0, arg2], f32
    # bias_ref:   (bB, 1, S)    additive mask (0.0 / -1e30), f32
    # out_ref:    (bB, 2, Ep)   row0 = ctx1, row1 = ctx2 (lane-dense: Ep % 128 == 0)
    bB, S, Ep = enc_ref.shape
    A2 = w_ref.shape[1]

    enc = enc_ref[...]                                            # (bB, S, Ep)

    # One batched MXU matmul for both branches and the whole batch block:
    # (bB*S, Ep) @ (Ep, 2A), f32 accumulation; tanh stays in f32.
    proj = jnp.tanh(
        jnp.dot(enc.reshape(bB * S, Ep), w_ref[...],
                preferred_element_type=jnp.float32) + b_ref[...])
    proj = proj.reshape(bB, S, A2)                                # (bB, S, 2A) f32

    # Both branch score rows at once: (bB,2,2A) x (bB,S,2A) -> (bB,2,S).
    scores = lax.dot_general(argblk_ref[...], proj,
                             (((2,), (2,)), ((0,), (0,))),
                             preferred_element_type=jnp.float32)
    scores = scores + bias_ref[...]                               # broadcast over branch dim

    # Softmax over the sequence (lane) axis.
    m = jnp.max(scores, axis=-1, keepdims=True)
    e = jnp.exp(scores - m)
    denom = jnp.sum(e, axis=-1, keepdims=True)
    if approx_recip:
        att = e * pl.reciprocal(denom, approx=True)               # EUP slot (free-ish)
    else:
        att = e / denom                                           # exact (f32 test path)

    # Contexts: (bB,2,S) x (bB,S,Ep) -> (bB,2,Ep), f32 accumulation, lane-dense store.
    ctx = lax.dot_general(att.astype(enc.dtype), enc,
                          (((2,), (1,)), ((0,), (0,))),
                          preferred_element_type=jnp.float32)
    out_ref[...] = ctx.astype(out_ref.dtype)


def prepare_sentiment_attention_params(W1, b1, W2, b2, *, mxu_dtype=jnp.bfloat16):
    """One-time (parameter-load time) weight prep: stack, pre-transpose, lane-pad."""
    A, E = W1.shape
    Ep = _round_up(E, 128)
    w_st = jnp.concatenate([W1.T, W2.T], axis=1)                    # (E, 2A)
    w_st = jnp.pad(w_st, ((0, Ep - E), (0, 0))).astype(mxu_dtype)   # (Ep, 2A)
    b_st = jnp.concatenate([b1, b2]).reshape(1, 2 * A).astype(jnp.float32)
    return dict(w_st=w_st, b_st=b_st, E=E, Ep=Ep, A=A, mxu_dtype=mxu_dtype)


def sentiment_attention(arg1, arg2, enc_hs, src_mask, params):
    B, S, E = enc_hs.shape
    Ep, A = params["Ep"], params["A"]
    mxu_dtype = params["mxu_dtype"]
    assert E == params["E"]

    # Lane-pad encoder states (no-op when E is already a multiple of 128).
    enc_p = enc_hs
    if Ep != E:
        enc_p = jnp.pad(enc_hs, ((0, 0), (0, 0), (0, Ep - E)))
    enc_p = enc_p.astype(mxu_dtype)

    # Block-structured args so both branch score rows come from one batched dot.
    z = jnp.zeros_like(arg1)
    arg_blk = jnp.stack(
        [jnp.concatenate([arg1, z], axis=-1),
         jnp.concatenate([z, arg2], axis=-1)], axis=1).astype(jnp.float32)   # (B, 2, 2A)

    # Additive mask bias (finite: exp underflows to exactly 0, matching -inf, no NaN).
    bias = jnp.where(src_mask, jnp.float32(-1e30), jnp.float32(0.0))[:, None, :]  # (B,1,S)

    # Batch tiling: whole batch in one step for toy sizes, 8-row tiles otherwise,
    # sharded over TensorCores via the "parallel" grid axis.
    if B <= 8:
        bB = B
    else:
        bB = next(c for c in (8, 4, 2, 1) if B % c == 0)
    grid = (B // bB,)

    kernel = partial(sentiment_attention_kernel,
                     approx_recip=(mxu_dtype != jnp.float32))

    out = pl.pallas_call(
        kernel,
        grid=grid,
        in_specs=[
            pl.BlockSpec((bB, S, Ep), lambda i: (i, 0, 0)),      # enc (tiled over batch)
            pl.BlockSpec((Ep, 2 * A), lambda i: (0, 0)),         # stacked weights (resident)
            pl.BlockSpec((1, 2 * A), lambda i: (0, 0)),          # stacked bias (resident)
            pl.BlockSpec((bB, 2, 2 * A), lambda i: (i, 0, 0)),   # per-batch arg block
            pl.BlockSpec((bB, 1, S), lambda i: (i, 0, 0)),       # additive mask bias
        ],
        out_specs=pl.BlockSpec((bB, 2, Ep), lambda i: (i, 0, 0)),
        out_shape=jax.ShapeDtypeStruct((B, 2, Ep), jnp.float32),
        compiler_params=pltpu.CompilerParams(dimension_semantics=("parallel",)),
    )(enc_p, params["w_st"], params["b_st"], arg_blk, bias)

    # (B, 2, Ep) -> drop lane padding -> (B, 2E); row-major reshape == concat(ctx1, ctx2).
    return out[:, :, :E].reshape(B, 2 * E)


def reference(arg1, arg2, enc_hs, src_mask, W1, b1, W2, b2):
    def one(arg, W, b):
        proj = jnp.tanh(jnp.einsum('bse,ae->bsa', enc_hs, W) + b)
        s = jnp.einsum('bsa,ba->bs', proj, arg)
        s = jnp.where(src_mask, -jnp.inf, s)
        att = jax.nn.softmax(s, axis=-1)
        return jnp.einsum('bs,bse->be', att, enc_hs)
    return jnp.concatenate([one(arg1, W1, b1), one(arg2, W2, b2)], axis=-1)


if __name__ == "__main__":
    B, S, E, A = 2, 8, 32, 16   # batch, seq, enc_hid_dim, arg_dim (=2*pointer_net_hidden)

    key = jax.random.PRNGKey(0)
    k_enc, k_a1, k_a2, k_w1, k_b1, k_w2, k_b2 = jax.random.split(key, 7)

    enc_hs = jax.random.normal(k_enc, (B, S, E), dtype=jnp.float32)
    arg1 = jax.random.normal(k_a1, (B, A), dtype=jnp.float32)
    arg2 = jax.random.normal(k_a2, (B, A), dtype=jnp.float32)

    # PyTorch Linear default init: U(-1/sqrt(fan_in), 1/sqrt(fan_in))
    bound = 1.0 / np.sqrt(E)
    W1 = jax.random.uniform(k_w1, (A, E), jnp.float32, -bound, bound)
    b1 = jax.random.uniform(k_b1, (A,), jnp.float32, -bound, bound)
    W2 = jax.random.uniform(k_w2, (A, E), jnp.float32, -bound, bound)
    b2 = jax.random.uniform(k_b2, (A,), jnp.float32, -bound, bound)

    # Deterministic padding mask (True == masked), never all-True per row.
    mask_np = np.zeros((B, S), dtype=bool)
    mask_np[0, S - 2:] = True
    mask_np[1, S - 1:] = True
    src_mask = jnp.asarray(mask_np)

    ref = reference(arg1, arg2, enc_hs, src_mask, W1, b1, W2, b2)

    # 1) f32 MXU operands + exact divide: tight semantic check against the reference.
    params_f32 = prepare_sentiment_attention_params(W1, b1, W2, b2, mxu_dtype=jnp.float32)
    out_f32 = jax.block_until_ready(
        sentiment_attention(arg1, arg2, enc_hs, src_mask, params_f32))
    np.testing.assert_allclose(np.asarray(out_f32), np.asarray(ref),
                               rtol=1e-4, atol=1e-4)

    # 2) Production path: bf16 MXU operands, f32 accumulation, EUP approx reciprocal.
    #    Loose tolerance accounts for bf16 operand rounding (logic already verified above).
    params_bf16 = prepare_sentiment_attention_params(W1, b1, W2, b2, mxu_dtype=jnp.bfloat16)
    out_bf16 = jax.block_until_ready(
        sentiment_attention(arg1, arg2, enc_hs, src_mask, params_bf16))
    np.testing.assert_allclose(np.asarray(out_bf16), np.asarray(ref),
                               rtol=1e-1, atol=1e-1)

    print("KERNEL_OK")
</pallas_src>

<mosaic_0001>
module attributes {stable_mosaic.version = 11 : i64} {
  func.func @sentiment_attention_kernel(%arg0: i32, %arg1: memref<2x8x128xf32, #tpu.memory_space<vmem>>, %arg2: memref<128x32xf32, #tpu.memory_space<vmem>>, %arg3: memref<1x32xf32, #tpu.memory_space<vmem>>, %arg4: memref<2x2x32xf32, #tpu.memory_space<vmem>>, %arg5: memref<2x1x8xf32, #tpu.memory_space<vmem>>, %arg6: memref<2x2x128xf32, #tpu.memory_space<vmem>>) attributes {dimension_semantics = [#tpu.dimension_semantics<parallel>], iteration_bounds = array<i64: 1>, scalar_prefetch = 0 : i64, scratch_operands = 0 : i64, tpu.core_type = #tpu.core_type<tc>, window_params = [{transform_indices = @transform_0, window_bounds = array<i64: 2, 8, 128>}, {pipeline_mode = #tpu.pipeline_mode<synchronous>, transform_indices = @transform_1, window_bounds = array<i64: 128, 32>}, {pipeline_mode = #tpu.pipeline_mode<synchronous>, transform_indices = @transform_2, window_bounds = array<i64: 1, 32>}, {transform_indices = @transform_3, window_bounds = array<i64: 2, 2, 32>}, {transform_indices = @transform_4, window_bounds = array<i64: 2, 1, 8>}, {transform_indices = @transform_5, window_bounds = array<i64: 2, 2, 128>}]} {
    %c0 = arith.constant 0 : index
    %c0_0 = arith.constant 0 : index
    %c0_1 = arith.constant 0 : index
    %0 = vector.load %arg1[%c0, %c0_0, %c0_1] : memref<2x8x128xf32, #tpu.memory_space<vmem>>, vector<2x8x128xf32>
    %1 = vector.shape_cast %0 : vector<2x8x128xf32> to vector<16x128xf32>
    %c0_2 = arith.constant 0 : index
    %c0_3 = arith.constant 0 : index
    %2 = vector.load %arg2[%c0_2, %c0_3] : memref<128x32xf32, #tpu.memory_space<vmem>>, vector<128x32xf32>
    %cst = arith.constant dense<0.000000e+00> : vector<16x32xf32>
    %3 = tpu.matmul %1, %2, %cst {dimension_numbers = #tpu.dot_dimension_numbers<[1], [0], [0], [1], [0, 0, 1, 1], [], []>} : vector<16x128xf32>, vector<128x32xf32>, vector<16x32xf32> -> vector<16x32xf32>
    %c0_4 = arith.constant 0 : index
    %c0_5 = arith.constant 0 : index
    %4 = vector.load %arg3[%c0_4, %c0_5] : memref<1x32xf32, #tpu.memory_space<vmem>>, vector<1x32xf32>
    %5 = vector.broadcast %4 : vector<1x32xf32> to vector<16x32xf32>
    %6 = arith.addf %3, %5 : vector<16x32xf32>
    %7 = math.tanh %6 : vector<16x32xf32>
    %8 = vector.shape_cast %7 : vector<16x32xf32> to vector<2x8x32xf32>
    %c0_6 = arith.constant 0 : index
    %c0_7 = arith.constant 0 : index
    %c0_8 = arith.constant 0 : index
    %9 = vector.load %arg4[%c0_6, %c0_7, %c0_8] : memref<2x2x32xf32, #tpu.memory_space<vmem>>, vector<2x2x32xf32>
    %cst_9 = arith.constant dense<0.000000e+00> : vector<2x2x8xf32>
    %10 = tpu.matmul %9, %8, %cst_9 {dimension_numbers = #tpu.dot_dimension_numbers<[2], [2], [1], [1], [0, 0, 0, 1, 1, 1], [0], [0]>} : vector<2x2x32xf32>, vector<2x8x32xf32>, vector<2x2x8xf32> -> vector<2x2x8xf32>
    %c0_10 = arith.constant 0 : index
    %c0_11 = arith.constant 0 : index
    %c0_12 = arith.constant 0 : index
    %11 = vector.load %arg5[%c0_10, %c0_11, %c0_12] : memref<2x1x8xf32, #tpu.memory_space<vmem>>, vector<2x1x8xf32>
    %12 = vector.broadcast %11 : vector<2x1x8xf32> to vector<2x2x8xf32>
    %13 = arith.addf %10, %12 : vector<2x2x8xf32>
    %cst_13 = arith.constant dense<0xFF800000> : vector<2x2xf32>
    %14 = vector.multi_reduction <maximumf>, %13, %cst_13 [2] : vector<2x2x8xf32> to vector<2x2xf32>
    %15 = vector.shape_cast %14 : vector<2x2xf32> to vector<2x2x1xf32>
    %16 = vector.broadcast %15 : vector<2x2x1xf32> to vector<2x2x8xf32>
    %17 = arith.subf %13, %16 : vector<2x2x8xf32>
    %18 = math.exp %17 : vector<2x2x8xf32>
    %cst_14 = arith.constant dense<0.000000e+00> : vector<2x2xf32>
    %19 = vector.multi_reduction <add>, %18, %cst_14 [2] : vector<2x2x8xf32> to vector<2x2xf32>
    %20 = vector.shape_cast %19 : vector<2x2xf32> to vector<2x2x1xf32>
    %21 = vector.broadcast %20 : vector<2x2x1xf32> to vector<2x2x8xf32>
    %22 = arith.divf %18, %21 : vector<2x2x8xf32>
    %cst_15 = arith.constant dense<0.000000e+00> : vector<2x2x128xf32>
    %23 = tpu.matmul %22, %0, %cst_15 {dimension_numbers = #tpu.dot_dimension_numbers<[2], [1], [1], [2], [0, 0, 0, 1, 1, 2], [0], [0]>} : vector<2x2x8xf32>, vector<2x8x128xf32>, vector<2x2x128xf32> -> vector<2x2x128xf32>
    %c0_16 = arith.constant 0 : index
    %c0_17 = arith.constant 0 : index
    %c0_18 = arith.constant 0 : index
    %24 = vector.load %arg6[%c0_16, %c0_17, %c0_18] : memref<2x2x128xf32, #tpu.memory_space<vmem>>, vector<2x2x128xf32>
    tpu.vector_store %arg6[%c0_16, %c0_17, %c0_18], %23 {strides = array<i32>} : memref<2x2x128xf32, #tpu.memory_space<vmem>>, vector<2x2x128xf32>,
    return
  }
  func.func @transform_0(%arg0: i32) -> (i32, i32, i32) {
    %c0_i32 = arith.constant 0 : i32
    %c0_i32_0 = arith.constant 0 : i32
    %c0_i32_1 = arith.constant 0 : i32
    return %arg0, %c0_i32, %c0_i32_0 : i32, i32, i32
  }
  func.func @transform_1(%arg0: i32) -> (i32, i32) {
    %c0_i32 = arith.constant 0 : i32
    %c0_i32_0 = arith.constant 0 : i32
    %c0_i32_1 = arith.constant 0 : i32
    return %c0_i32, %c0_i32_0 : i32, i32
  }
  func.func @transform_2(%arg0: i32) -> (i32, i32) {
    %c0_i32 = arith.constant 0 : i32
    %c0_i32_0 = arith.constant 0 : i32
    %c0_i32_1 = arith.constant 0 : i32
    return %c0_i32, %c0_i32_0 : i32, i32
  }
  func.func @transform_3(%arg0: i32) -> (i32, i32, i32) {
    %c0_i32 = arith.constant 0 : i32
    %c0_i32_0 = arith.constant 0 : i32
    %c0_i32_1 = arith.constant 0 : i32
    return %arg0, %c0_i32, %c0_i32_0 : i32, i32, i32
  }
  func.func @transform_4(%arg0: i32) -> (i32, i32, i32) {
    %c0_i32 = arith.constant 0 : i32
    %c0_i32_0 = arith.constant 0 : i32
    %c0_i32_1 = arith.constant 0 : i32
    return %arg0, %c0_i32, %c0_i32_0 : i32, i32, i32
  }
  func.func @transform_5(%arg0: i32) -> (i32, i32, i32) {
    %c0_i32 = arith.constant 0 : i32
    %c0_i32_0 = arith.constant 0 : i32
    %c0_i32_1 = arith.constant 0 : i32
    return %arg0, %c0_i32, %c0_i32_0 : i32, i32, i32
  }
}

</mosaic_0001>

<llo_original>
// kernel: tpu_custom_call.1
$region0: #{tpu_custom_call.1}
  #allocation0 [shape = 'u32[]', space=smem, size = 0x4, offset = 0x4, fixed_abs, tag = 'smem constant byte address 0x4 - core index']
  #allocation1 [shape = 'u32[72,128]{1,0:T(1,128)}', space=vmem, size = 0x9000, scoped, tag = 'internal scratch']
  %s0 = inlined_call_operand.vmem [shape: f32[2,8,128], index: 0, kind: input, shape index: {}]
  %s1 = inlined_call_operand.vmem [shape: f32[128,32], index: 1, kind: input, shape index: {}]
  %s2 = inlined_call_operand.vmem [shape: f32[1,32], index: 2, kind: input, shape index: {}]
  %s3 = inlined_call_operand.vmem [shape: f32[2,2,32], index: 3, kind: input, shape index: {}]
  %s4 = inlined_call_operand.vmem [shape: f32[2,1,8], index: 4, kind: input, shape index: {}]
  %s5 = inlined_call_operand.hbm [shape: f32[2,2,128], index: 5, kind: output, shape index: {}]
  %s6 = sld [smem:[#allocation0]]
  $region30: #{tpu_custom_call.1} parent=0
    _
  %s8 = ssub.s32 1, %s6
  %s9 = scalar_select 0, %s8, %s6
  $region1: #{tpu_custom_call.1} parent=0
    #allocation2 [shape = 'u8[2048]{0}', space=vmem, size = 0x800, scoped, tag = 'output window, operand 0, single buffered']
    #allocation3 [shape = 's32[1]{0}', space=sflag, size = 0x4, scoped, tag = 'scoped memory for tpu_custom_call.1']
    %10 = vsyncpa [#allocation3], 0
    // Predicated region
    $region2: #{tpu_custom_call.1} parent=1 // pred_check
      _
    $region3: #{tpu_custom_call.1} parent=1 // pred_check_branch
      %12 = sbr.rel (0) target = $region5
    $region4: #{tpu_custom_call.1} parent=1 // pred_region
      _
    $region5: #{tpu_custom_call.1} parent=1 // pred_fallthru
      _
    // Predicated region
    $region6: #{tpu_custom_call.1} parent=1 // pred_check
      _
    $region7: #{tpu_custom_call.1} parent=1 // pred_check_branch
      %14 = sbr.rel (0) target = $region9
    $region8: #{tpu_custom_call.1} parent=1 // pred_region
      _
    $region9: #{tpu_custom_call.1} parent=1 // pred_fallthru
      _
    // Predicated region
    $region10: #{tpu_custom_call.1} parent=1 // pred_check
      _
    $region11: #{tpu_custom_call.1} parent=1 // pred_check_branch
      %16 = sbr.rel (0) target = $region13
    $region12: #{tpu_custom_call.1} parent=1 // pred_region
      _
    $region13: #{tpu_custom_call.1} parent=1 // pred_fallthru
      _
    // Predicated region
    $region14: #{tpu_custom_call.1} parent=1 // pred_check
      _
    $region15: #{tpu_custom_call.1} parent=1 // pred_check_branch
      %18 = sbr.rel (0) target = $region17
    $region16: #{tpu_custom_call.1} parent=1 // pred_region
      _
    $region17: #{tpu_custom_call.1} parent=1 // pred_fallthru
      _
    // Predicated region
    $region18: #{tpu_custom_call.1} parent=1 // pred_check
      _
    $region19: #{tpu_custom_call.1} parent=1 // pred_check_branch
      %20 = sbr.rel (0) target = $region21
    $region20: #{tpu_custom_call.1} parent=1 // pred_region
      _
    $region21: #{tpu_custom_call.1} parent=1 // pred_fallthru
      _
    %v21 = vld [vmem:[%s0] sm:$0xff]
    %v22 = vld [vmem:[%s0 + $0x8] sm:$0xff]
    %v23 = vld [vmem:[%s1] sm:$0xff]
    %v24 = vld [vmem:[%s1 + $0x8] sm:$0xff]
    %v25 = vld [vmem:[%s1 + $0x10] sm:$0xff]
    %v26 = vld [vmem:[%s1 + $0x18] sm:$0xff]
    %v27 = vld [vmem:[%s1 + $0x20] sm:$0xff]
    %v28 = vld [vmem:[%s1 + $0x28] sm:$0xff]
    %v29 = vld [vmem:[%s1 + $0x30] sm:$0xff]
    %v30 = vld [vmem:[%s1 + $0x38] sm:$0xff]
    %v31 = vld [vmem:[%s1 + $0x40] sm:$0xff]
    %v32 = vld [vmem:[%s1 + $0x48] sm:$0xff]
    %v33 = vld [vmem:[%s1 + $0x50] sm:$0xff]
    %v34 = vld [vmem:[%s1 + $0x58] sm:$0xff]
    %v35 = vld [vmem:[%s1 + $0x60] sm:$0xff]
    %v36 = vld [vmem:[%s1 + $0x68] sm:$0xff]
    %v37 = vld [vmem:[%s1 + $0x70] sm:$0xff]
    %v38 = vld [vmem:[%s1 + $0x78] sm:$0xff]
    %v39 = vld [vmem:[%s2] sm:$0x1]
    %v41 = vperm.slane %v39, 0
    %43 = vmatpush.msra.mxu0 %v38
    %44 = vmatpush.msra.mxu0 %v37
    %45 = vmatpush.msra.mxu0 %v36
    %46 = vmatpush.msra.mxu0 %v35
    %47 = vmatpush.msra.mxu0 %v34
    %48 = vmatpush.msra.mxu0 %v33
    %49 = vmatpush.msra.mxu0 %v32
    %50 = vmatpush.msra.mxu0 %v31
    %51 = vmatpush.msra.mxu0 %v30
    %52 = vmatpush.msra.mxu0 %v29
    %53 = vmatpush.msra.mxu0 %v28
    %54 = vmatpush.msra.mxu0 %v27
    %55 = vmatpush.msra.mxu0 %v26
    %56 = vmatpush.msra.mxu0 %v25
    %57 = vmatpush.msra.mxu0 %v24
    %58 = vmatpush.msra.mxu0 %v23
    %59 = vmatmul.f32.gmra.mxu0 %v21
    %v60 = vpop.f32.mrf.mxu0
    %v61 = vadd.f32 %v41, %v60
    %62 = vmatmul.f32.gmra.mxu0 %v22
    %v63 = vpop.f32.mrf.mxu0
    %v64 = vadd.f32 %v41, %v63
    %65 = vdwg.mxu0
    %v66 = vtanh.pop %v61
    %v67 = vtanh.pop %v64
    %v68 = vld [vmem:[%s3] sm:$0x3]
    %v69 = vld [vmem:[%s3 + $0x2] sm:$0x3]
    %v70 = vld [vmem:[%s4] sm:$0x1]
    %v71 = vld [vmem:[%s4 + $0x1] sm:$0x1]
    %v74 = vperm.slane %v70, 0
    %v75 = vperm.slane %v71, 0
    %vm78 = vcmask 261120
    %v80 = vsel %vm78, %v68, 0
    %v83 = vsel %vm78, %v66, 0
    %85 = vmatpush.xpose.msra.mxu0 0.0
    %86 = vmatpush.xpose.msra.mxu0 0.0
    %87 = vmatpush.xpose.msra.mxu0 0.0
    %88 = vmatpush.xpose.msra.mxu0 0.0
    %89 = vmatpush.xpose.msra.mxu0 0.0
    %90 = vmatpush.xpose.msra.mxu0 0.0
    %91 = vmatpush.xpose.msra.mxu0 0.0
    %92 = vmatpush.xpose.msra.mxu0 0.0
    %93 = vmatpush.xpose.msra.mxu0 0.0
    %94 = vmatpush.xpose.msra.mxu0 0.0
    %95 = vmatpush.xpose.msra.mxu0 0.0
    %96 = vmatpush.xpose.msra.mxu0 0.0
    %97 = vmatpush.xpose.msra.mxu0 0.0
    %98 = vmatpush.xpose.msra.mxu0 0.0
    %99 = vmatpush.xpose.msra.mxu0 0.0
    %100 = vmatpush.xpose.msra.mxu0 %v83
    %101 = vmatmul.f32.gmra.mxu0 %v80
    %v102 = vpop.f32.mrf.mxu0
    %v103 = vadd.f32 %v74, %v102
    %104 = vdwg.mxu0
    %v106 = vsel %vm78, %v69, 0
    %v109 = vsel %vm78, %v67, 0
    %111 = vmatpush.xpose.msra.mxu0 0.0
    %112 = vmatpush.xpose.msra.mxu0 0.0
    %113 = vmatpush.xpose.msra.mxu0 0.0
    %114 = vmatpush.xpose.msra.mxu0 0.0
    %115 = vmatpush.xpose.msra.mxu0 0.0
    %116 = vmatpush.xpose.msra.mxu0 0.0
    %117 = vmatpush.xpose.msra.mxu0 0.0
    %118 = vmatpush.xpose.msra.mxu0 0.0
    %119 = vmatpush.xpose.msra.mxu0 0.0
    %120 = vmatpush.xpose.msra.mxu0 0.0
    %121 = vmatpush.xpose.msra.mxu0 0.0
    %122 = vmatpush.xpose.msra.mxu0 0.0
    %123 = vmatpush.xpose.msra.mxu0 0.0
    %124 = vmatpush.xpose.msra.mxu0 0.0
    %125 = vmatpush.xpose.msra.mxu0 0.0
    %126 = vmatpush.xpose.msra.mxu0 %v109
    %127 = vmatmul.f32.gmra.mxu0 %v106
    %v128 = vpop.f32.mrf.mxu0
    %v129 = vadd.f32 %v75, %v128
    %130 = vdwg.mxu0
    %vm131 = vcmask 58368
    %v132 = vsel %vm131, %v103, -inf
    %133 = vmax.xlane.f32.xlu0 %v132
    %v134 = vpop.xlane.xlu0 %133
    %v135 = vsel %vm131, %v129, -inf
    %136 = vmax.xlane.f32.xlu0 %v135
    %v137 = vpop.xlane.xlu0 %136
    %v138 = vsub.f32 %v103, %v134
    %v139 = vsub.f32 %v129, %v137
    %v140 = vmul.f32 %v138, 1.442695
    %v141 = vpow.pop %v140
    %v142 = vmul.f32 %v139, 1.442695
    %v143 = vpow.pop %v142
    %v144 = vsel %vm131, %v141, 0.0
    %145 = vadd.xlane.f32.xlu0 %v144
    %v146 = vpop.xlane.xlu0 %145
    %v147 = vsel %vm131, %v143, 0.0
    %148 = vadd.xlane.f32.xlu0 %v147
    %v149 = vpop.xlane.xlu0 %148
    %v150 = vrcp.pop %v146
    %v151 = vmul.f32 %v146, %v150
    %v152 = vsub.f32 1.0, %v151
    %v153 = vmul.f32 %v150, %v152
    %v154 = vadd.f32 %v150, %v153
    %vm155 = vweird.f32 %v146
    %vm156 = vweird.f32 %v150
    %vm157 = vmor %vm155, %vm156
    %v158 = vsel %vm157, %v150, %v154
    %v159 = vand.u32 2147483647, %v146
    %vm160 = vcmp.eq.f32.partialorder %v159, 8.507059e+37
    %v161 = vand.u32 %v146, 2147483648
    %v162 = vor.u32 1.1754944e-38, %v161
    %v163 = vsel %vm160, %v162, %v158
    %v164 = vmul.f32 %v141, %v163
    %v165 = vrcp.pop %v149
    %v166 = vmul.f32 %v149, %v165
    %v167 = vsub.f32 1.0, %v166
    %v168 = vmul.f32 %v165, %v167
    %v169 = vadd.f32 %v165, %v168
    %vm170 = vweird.f32 %v149
    %vm171 = vweird.f32 %v165
    %vm172 = vmor %vm170, %vm171
    %v173 = vsel %vm172, %v165, %v169
    %v174 = vand.u32 2147483647, %v149
    %vm175 = vcmp.eq.f32.partialorder %v174, 8.507059e+37
    %v176 = vand.u32 %v149, 2147483648
    %v177 = vor.u32 1.1754944e-38, %v176
    %v178 = vsel %vm175, %v177, %v173
    %v179 = vmul.f32 %v143, %v178
    %vm180 = vcmask 64512
    %v182 = vsel %vm180, %v164, 0
    %184 = vmatpush.msra.mxu0 0.0
    %185 = vmatpush.msra.mxu0 0.0
    %186 = vmatpush.msra.mxu0 0.0
    %187 = vmatpush.msra.mxu0 0.0
    %188 = vmatpush.msra.mxu0 0.0
    %189 = vmatpush.msra.mxu0 0.0
    %190 = vmatpush.msra.mxu0 0.0
    %191 = vmatpush.msra.mxu0 0.0
    %192 = vmatpush.msra.mxu0 0.0
    %193 = vmatpush.msra.mxu0 0.0
    %194 = vmatpush.msra.mxu0 0.0
    %195 = vmatpush.msra.mxu0 0.0
    %196 = vmatpush.msra.mxu0 0.0
    %197 = vmatpush.msra.mxu0 0.0
    %198 = vmatpush.msra.mxu0 0.0
    %199 = vmatpush.msra.mxu0 %v21
    %200 = vmatmul.f32.gmra.mxu0 %v182
    %v201 = vpop.f32.mrf.mxu0
    %v202 = vadd.f32 0.0, %v201
    %203 = vdwg.mxu0
    %v205 = vsel %vm180, %v179, 0
    %207 = vmatpush.msra.mxu0 0.0
    %208 = vmatpush.msra.mxu0 0.0
    %209 = vmatpush.msra.mxu0 0.0
    %210 = vmatpush.msra.mxu0 0.0
    %211 = vmatpush.msra.mxu0 0.0
    %212 = vmatpush.msra.mxu0 0.0
    %213 = vmatpush.msra.mxu0 0.0
    %214 = vmatpush.msra.mxu0 0.0
    %215 = vmatpush.msra.mxu0 0.0
    %216 = vmatpush.msra.mxu0 0.0
    %217 = vmatpush.msra.mxu0 0.0
    %218 = vmatpush.msra.mxu0 0.0
    %219 = vmatpush.msra.mxu0 0.0
    %220 = vmatpush.msra.mxu0 0.0
    %221 = vmatpush.msra.mxu0 0.0
    %222 = vmatpush.msra.mxu0 %v22
    %223 = vmatmul.f32.gmra.mxu0 %v205
    %v224 = vpop.f32.mrf.mxu0
    %v225 = vadd.f32 0.0, %v224
    %226 = vdwg.mxu0
    %227 = vst [vmem:[#allocation2] sm:$0x3] %v202
    %228 = vst [vmem:[#allocation2 + $0x2] sm:$0x3] %v225
    // Predicated region
    $region22: #{tpu_custom_call.1} parent=1 // pred_check
      _
    $region23: #{tpu_custom_call.1} parent=1 // pred_check_branch
      %230 = sbr.rel (0) target = $region25
    $region24: #{tpu_custom_call.1} parent=1 // pred_region
      %232 = vsyncadd [#allocation3], 0
      %s233 = sshll.u32 [#allocation2], 4
      %s234 = int_to_ptr.vmem [resolvable:$true] %s233
      %s235 = sshll.u32 %s5, 4
      %s236 = int_to_ptr.hbm [resolvable:$true] %s235
      %241 = dma.vmem_to_hbm [thread:$0]  %s234, 64, %s236, [#allocation3], 32, 32, 2
    $region25: #{tpu_custom_call.1} parent=1 // pred_fallthru
      _
    // Predicated region
    $region26: #{tpu_custom_call.1} parent=1 // pred_check
      _
    $region27: #{tpu_custom_call.1} parent=1 // pred_check_branch
      %243 = sbr.rel (0) target = $region29
    $region28: #{tpu_custom_call.1} parent=1 // pred_region
      %245 = dma.done [#allocation3], 64
    $region29: #{tpu_custom_call.1} parent=1 // pred_fallthru
      _
    %246 = vsyncpa [#allocation3], 1

</llo_original>
